<compile_context>
chip_gen: v7x
topology: tpu7x:2x2x1
jax: 0.10.0
libtpu: 0.0.40
codegen_flags: <defaults>
</compile_context>

<pallas_src>
import functools

import numpy as np
import jax
import jax.numpy as jnp
from jax import lax
from jax.experimental import pallas as pl
from jax.experimental.pallas import tpu as pltpu


def _round_up(x, m):
    return ((x + m - 1) // m) * m


# ----------------------------------------------------------------------------
# Pallas kernel
# ----------------------------------------------------------------------------
def _ke_kernel(x_ref, posT_ref, negT_ref, wp_ref, wn_ref, dbias_ref, out_ref,
               *, rchunk, hoist_constants):
    # x_ref:     VMEM (TB, Pp)   ground-atom pre-activations (batch tile, native dtype)
    # posT_ref:  VMEM (Pp, Cp)   positive-literal mask, transposed
    # negT_ref:  VMEM (Pp, Cp)   negative-literal mask, transposed
    # wp_ref:    VMEM (Cp, Pp)   +w_c on positive literals, 0 elsewhere
    # wn_ref:    VMEM (Cp, Pp)   -w_c on negative literals, 0 elsewhere
    # dbias_ref: VMEM (1,  Cp)   eps on real clauses, 1.0 on padded clauses
    # out_ref:   VMEM (TB, Pp)   summed scattered deltas (native dtype)
    c_pad = dbias_ref.shape[1]

    # Hoist small constants; for large P*C re-load inside the loop instead to
    # keep vreg live ranges bounded across the unrolled iterations.
    if hoist_constants:
        posT_h = posT_ref[...]
        negT_h = negT_ref[...]
        wp_h = wp_ref[...]
        wn_h = wn_ref[...]

    # broadcast_in_dim is not CSE'd by JAX: hoist it out of the unrolled loop.
    dbias_b = jnp.broadcast_to(dbias_ref[...], (rchunk, c_pad))

    n_chunks = x_ref.shape[0] // rchunk

    def body(i, carry):
        r0 = pl.multiple_of(i * rchunk, rchunk)
        x = x_ref[pl.ds(r0, rchunk), :].astype(jnp.float32)    # [R, Pp]
        shift = jnp.max(jnp.abs(x), axis=-1, keepdims=True)    # [R, 1]  (XLU)
        ep = jnp.exp(x - shift)                                 # [R, Pp] (EUP)
        en = jnp.exp(-x - shift)                                # [R, Pp] (EUP)
        if hoist_constants:
            posT, negT, wp, wn = posT_h, negT_h, wp_h, wn_h
        else:
            posT, negT, wp, wn = posT_ref[...], negT_ref[...], wp_ref[...], wn_ref[...]
        # Per-clause softmax denominators via MXU.
        denom = (jnp.dot(ep, posT, preferred_element_type=jnp.float32)
                 + jnp.dot(en, negT, preferred_element_type=jnp.float32)
                 + dbias_b)                                     # [R, Cp]
        inv = pl.reciprocal(denom)          # exact: denom is only [R, Cp]
        # Weighted signed accumulation over clauses via MXU.
        out = (ep * jnp.dot(inv, wp, preferred_element_type=jnp.float32)
               + en * jnp.dot(inv, wn, preferred_element_type=jnp.float32))
        out_ref[pl.ds(r0, rchunk), :] = out.astype(out_ref.dtype)
        return carry

    lax.fori_loop(0, n_chunks, body, 0, unroll=True)


# ----------------------------------------------------------------------------
# Host-side constant preparation (clause matrices, lane-dense padding)
# ----------------------------------------------------------------------------
def prepare_kernel_constants(signs, mask, weights):
    signs = np.asarray(signs, dtype=np.float32)
    mask = np.asarray(mask, dtype=np.float32)
    weights = np.asarray(weights, dtype=np.float32)
    C, P = signs.shape

    p_pad = _round_up(max(P, 128), 128)   # lane-dense predicate axis
    c_pad = _round_up(max(C, 128), 128)   # lane-dense clause axis (denom/inv)

    pos = (signs > 0).astype(np.float32) * mask
    neg = (signs < 0).astype(np.float32) * mask

    posT = np.zeros((p_pad, c_pad), np.float32)
    negT = np.zeros((p_pad, c_pad), np.float32)
    wp = np.zeros((c_pad, p_pad), np.float32)
    wn = np.zeros((c_pad, p_pad), np.float32)
    dbias = np.zeros((1, c_pad), np.float32)

    posT[:P, :C] = pos.T
    negT[:P, :C] = neg.T
    wp[:C, :P] = weights[:, None] * pos
    wn[:C, :P] = -weights[:, None] * neg
    # Real clauses: tiny eps so the denominator can never be exactly 0 (avoids
    # Inf/NaN through the inv@W matmuls); padded clauses: denom = 1, W rows = 0.
    dbias[0, :C] = 1e-37
    dbias[0, C:] = 1.0

    return (jnp.asarray(posT), jnp.asarray(negT),
            jnp.asarray(wp), jnp.asarray(wn), jnp.asarray(dbias))


# ----------------------------------------------------------------------------
# Forward wrapper
# ----------------------------------------------------------------------------
def knowledge_enhancer_forward(ground_atoms, constants, *, tb=512):
    posT, negT, wp, wn, dbias = constants
    B, P = ground_atoms.shape
    p_pad, c_pad = posT.shape

    # Lane-axis padding is only materialized when P is not already a multiple
    # of 128 (rowwise max|x| must not see garbage lanes; zero pad is safe since
    # max|x| >= 0 and the padded posT/negT/Wp/Wn entries are zero).
    x = ground_atoms
    if p_pad != P:
        x = jnp.pad(x, ((0, 0), (0, p_pad - P)))

    itemsize = int(np.dtype(x.dtype).itemsize)

    # Batch tile: derived from a VMEM tile budget (x + out, double-buffered)
    # so the same code fits v5e's 16 MiB scoped default and v7x's 64 MiB VMEM.
    TILE_BUDGET = 24 << 20
    row_bytes = p_pad * itemsize * 4            # 2 in buffers + 2 out buffers
    tb_cap = max(8, min(tb, (TILE_BUDGET // row_bytes) // 8 * 8))
    tb_eff = min(tb_cap, _round_up(B, 8))
    # v7x has 2 TensorCores: guarantee >= 2 grid steps when the batch is large
    # enough so the "parallel" batch axis can be sharded and the pipeline can
    # overlap DMA with compute.
    if B > 16 and pl.cdiv(B, tb_eff) < 2:
        tb_eff = max(8, _round_up(pl.cdiv(B, 2), 8))
    # Inner sub-chunk keeps ep/en/out vreg live ranges bounded.
    rchunk_target = 64 if p_pad <= 1024 else 32
    rchunk = next(r for r in (rchunk_target, 32, 16, 8) if tb_eff % r == 0)

    grid = (pl.cdiv(B, tb_eff),)   # partial last block: garbage rows only feed
                                   # discarded output rows (per-row math).

    # Only hoist the constant operand loads to the kernel top when small.
    hoist_constants = (p_pad * c_pad) <= (256 * 256)

    const_bytes = int(posT.size + negT.size + wp.size + wn.size + dbias.size) * 4
    tile_bytes = tb_eff * p_pad * itemsize * 4
    vmem_needed = tile_bytes + 2 * const_bytes + (4 << 20)
    vmem_limit = int(min(64 << 20, max(32 << 20, vmem_needed)))

    kernel = functools.partial(_ke_kernel, rchunk=rchunk,
                               hoist_constants=hoist_constants)

    def _run(constant_pipeline_mode):
        def cspec(shape):
            if constant_pipeline_mode is None:
                return pl.BlockSpec(shape, lambda i: (0, 0))
            return pl.BlockSpec(shape, lambda i: (0, 0),
                                pipeline_mode=constant_pipeline_mode)

        return pl.pallas_call(
            kernel,
            out_shape=jax.ShapeDtypeStruct((B, p_pad), ground_atoms.dtype),
            grid_spec=pltpu.PrefetchScalarGridSpec(
                num_scalar_prefetch=0,
                grid=grid,
                in_specs=[
                    pl.BlockSpec((tb_eff, p_pad), lambda i: (i, 0)),  # ground atoms
                    cspec((p_pad, c_pad)),                            # posT (resident)
                    cspec((p_pad, c_pad)),                            # negT (resident)
                    cspec((c_pad, p_pad)),                            # Wp   (resident)
                    cspec((c_pad, p_pad)),                            # Wn   (resident)
                    cspec((1, c_pad)),                                # denom bias
                ],
                out_specs=pl.BlockSpec((tb_eff, p_pad), lambda i: (i, 0)),
            ),
            compiler_params=pltpu.CompilerParams(
                dimension_semantics=("parallel",),
                vmem_limit_bytes=vmem_limit),
        )(x, posT, negT, wp, wn, dbias)

    # Single-buffer the grid-invariant constants; fall back to the default
    # buffering if this JAX/Mosaic build rejects pipeline_mode=Buffered(1).
    try:
        out = jax.block_until_ready(_run(pl.Buffered(1)))
    except Exception:
        out = _run(None)

    if p_pad != P:
        out = out[:, :P]
    return out


# ----------------------------------------------------------------------------
# "__init__" glue: parse KENN clause strings into dense sign/mask matrices.
# ----------------------------------------------------------------------------
def build_clause_tensors(predicates, clauses, initial_clause_weight=0.5):
    P = len(predicates)
    C = len(clauses)
    signs = np.zeros((C, P), dtype=np.float32)
    mask = np.zeros((C, P), dtype=np.float32)
    weights = np.zeros((C,), dtype=np.float32)
    pred_index = {p: i for i, p in enumerate(predicates)}
    for c, clause in enumerate(clauses):
        w_str, body = clause.split(':')
        weights[c] = (float(initial_clause_weight) if w_str == '_'
                      else float(w_str))
        for literal in body.split(','):
            literal = literal.strip()
            if literal.startswith('n'):
                sign, name = -1.0, literal[1:]
            else:
                sign, name = 1.0, literal
            j = pred_index[name]
            signs[c, j] = sign
            mask[c, j] = 1.0
    assert np.all(mask.sum(axis=1) >= 1.0), "every clause needs >= 1 literal"
    return signs, mask, weights


# Pure-JAX reference (mirrors the per-clause gather/softmax/scatter/sum).
def _reference_forward(x, signs, mask, w):
    z = x[:, None, :] * signs[None, :, :]
    z = jnp.where(mask[None, :, :] > 0, z, -1e30)
    p = jax.nn.softmax(z, axis=-1) * mask[None, :, :]
    delta = p * signs[None, :, :] * w[None, :, None]
    return delta.sum(axis=1)


if __name__ == "__main__":
    # Small deterministic setup: 32 predicates, 6 clauses, batch of 16.
    P = 32
    B = 16
    predicates = [f"P{i}" for i in range(P)]
    clauses = [
        "_:nP0,P3",
        "_:nP1,P3",
        "0.7:nP4,nP5,P6",
        "_:nP10,P11,P12",
        "1.2:nP20,P21",
        "_:nP30,P31,nP7",
    ]
    signs, mask, clause_weights = build_clause_tensors(
        predicates, clauses, initial_clause_weight=0.5)
    constants = prepare_kernel_constants(signs, mask, clause_weights)

    key = jax.random.PRNGKey(0)
    ground_atoms = jax.random.normal(key, (B, P), dtype=jnp.float32)

    out = knowledge_enhancer_forward(ground_atoms, constants)
    out = jax.block_until_ready(out)

    ref = _reference_forward(ground_atoms, jnp.asarray(signs),
                             jnp.asarray(mask), jnp.asarray(clause_weights))
    # Exact reciprocal on the denominator -> tight tolerance.
    np.testing.assert_allclose(np.asarray(out), np.asarray(ref),
                               rtol=1e-3, atol=1e-4)

    # TODO(synk): `save_training_data` path (per-clause light deltas + .item()
    # weights) is host-side bookkeeping and is not materialized by the kernel.
    print("KERNEL_OK")
</pallas_src>

<mosaic_0001>
module attributes {stable_mosaic.version = 11 : i64} {
  func.func @_ke_kernel(%arg0: i32, %arg1: memref<16x128xf32, #tpu.memory_space<vmem>>, %arg2: memref<128x128xf32, #tpu.memory_space<vmem>>, %arg3: memref<128x128xf32, #tpu.memory_space<vmem>>, %arg4: memref<128x128xf32, #tpu.memory_space<vmem>>, %arg5: memref<128x128xf32, #tpu.memory_space<vmem>>, %arg6: memref<1x128xf32, #tpu.memory_space<vmem>>, %arg7: memref<16x128xf32, #tpu.memory_space<vmem>>) attributes {dimension_semantics = [#tpu.dimension_semantics<parallel>], iteration_bounds = array<i64: 1>, scalar_prefetch = 0 : i64, scratch_operands = 0 : i64, tpu.core_type = #tpu.core_type<tc>, window_params = [{transform_indices = @transform_0, window_bounds = array<i64: 16, 128>}, {pipeline_mode = #tpu.pipeline_mode<synchronous>, transform_indices = @transform_1, window_bounds = array<i64: 128, 128>}, {pipeline_mode = #tpu.pipeline_mode<synchronous>, transform_indices = @transform_2, window_bounds = array<i64: 128, 128>}, {pipeline_mode = #tpu.pipeline_mode<synchronous>, transform_indices = @transform_3, window_bounds = array<i64: 128, 128>}, {pipeline_mode = #tpu.pipeline_mode<synchronous>, transform_indices = @transform_4, window_bounds = array<i64: 128, 128>}, {pipeline_mode = #tpu.pipeline_mode<synchronous>, transform_indices = @transform_5, window_bounds = array<i64: 1, 128>}, {transform_indices = @transform_6, window_bounds = array<i64: 16, 128>}]} {
    %c0 = arith.constant 0 : index
    %c0_0 = arith.constant 0 : index
    %0 = vector.load %arg2[%c0, %c0_0] : memref<128x128xf32, #tpu.memory_space<vmem>>, vector<128x128xf32>
    %c0_1 = arith.constant 0 : index
    %c0_2 = arith.constant 0 : index
    %1 = vector.load %arg3[%c0_1, %c0_2] : memref<128x128xf32, #tpu.memory_space<vmem>>, vector<128x128xf32>
    %c0_3 = arith.constant 0 : index
    %c0_4 = arith.constant 0 : index
    %2 = vector.load %arg4[%c0_3, %c0_4] : memref<128x128xf32, #tpu.memory_space<vmem>>, vector<128x128xf32>
    %c0_5 = arith.constant 0 : index
    %c0_6 = arith.constant 0 : index
    %3 = vector.load %arg5[%c0_5, %c0_6] : memref<128x128xf32, #tpu.memory_space<vmem>>, vector<128x128xf32>
    %c0_7 = arith.constant 0 : index
    %c0_8 = arith.constant 0 : index
    %4 = vector.load %arg6[%c0_7, %c0_8] : memref<1x128xf32, #tpu.memory_space<vmem>>, vector<1x128xf32>
    %5 = vector.shape_cast %4 : vector<1x128xf32> to vector<1x128xf32>
    %6 = vector.broadcast %5 : vector<1x128xf32> to vector<16x128xf32>
    %c0_i32 = arith.constant 0 : i32
    %c16_i32 = arith.constant 16 : i32
    %7 = arith.muli %c0_i32, %c16_i32 : i32
    %8 = tpu.assume_multiple %7, 16 : i32
    %9 = arith.index_cast %8 : i32 to index
    %c0_9 = arith.constant 0 : index
    %10 = vector.load %arg1[%9, %c0_9] : memref<16x128xf32, #tpu.memory_space<vmem>>, vector<16x128xf32>
    %11 = math.absf %10 : vector<16x128xf32>
    %cst = arith.constant dense<0xFF800000> : vector<16xf32>
    %12 = vector.multi_reduction <maximumf>, %11, %cst [1] : vector<16x128xf32> to vector<16xf32>
    %13 = vector.shape_cast %12 : vector<16xf32> to vector<16x1xf32>
    %14 = vector.broadcast %13 : vector<16x1xf32> to vector<16x128xf32>
    %15 = arith.subf %10, %14 : vector<16x128xf32>
    %16 = math.exp %15 : vector<16x128xf32>
    %cst_10 = arith.constant 0.000000e+00 : f32
    %17 = vector.broadcast %cst_10 : f32 to vector<16x128xf32>
    %18 = arith.subf %17, %10 : vector<16x128xf32>
    %19 = vector.broadcast %13 : vector<16x1xf32> to vector<16x128xf32>
    %20 = arith.subf %18, %19 : vector<16x128xf32>
    %21 = math.exp %20 : vector<16x128xf32>
    %cst_11 = arith.constant dense<0.000000e+00> : vector<16x128xf32>
    %22 = tpu.matmul %16, %0, %cst_11 {dimension_numbers = #tpu.dot_dimension_numbers<[1], [0], [0], [1], [0, 0, 1, 1], [], []>} : vector<16x128xf32>, vector<128x128xf32>, vector<16x128xf32> -> vector<16x128xf32>
    %cst_12 = arith.constant dense<0.000000e+00> : vector<16x128xf32>
    %23 = tpu.matmul %21, %1, %cst_12 {dimension_numbers = #tpu.dot_dimension_numbers<[1], [0], [0], [1], [0, 0, 1, 1], [], []>} : vector<16x128xf32>, vector<128x128xf32>, vector<16x128xf32> -> vector<16x128xf32>
    %24 = arith.addf %22, %23 : vector<16x128xf32>
    %25 = arith.addf %24, %6 : vector<16x128xf32>
    %26 = tpu.reciprocal %25 : vector<16x128xf32> -> vector<16x128xf32>
    %cst_13 = arith.constant dense<0.000000e+00> : vector<16x128xf32>
    %27 = tpu.matmul %26, %2, %cst_13 {dimension_numbers = #tpu.dot_dimension_numbers<[1], [0], [0], [1], [0, 0, 1, 1], [], []>} : vector<16x128xf32>, vector<128x128xf32>, vector<16x128xf32> -> vector<16x128xf32>
    %28 = arith.mulf %16, %27 : vector<16x128xf32>
    %cst_14 = arith.constant dense<0.000000e+00> : vector<16x128xf32>
    %29 = tpu.matmul %26, %3, %cst_14 {dimension_numbers = #tpu.dot_dimension_numbers<[1], [0], [0], [1], [0, 0, 1, 1], [], []>} : vector<16x128xf32>, vector<128x128xf32>, vector<16x128xf32> -> vector<16x128xf32>
    %30 = arith.mulf %21, %29 : vector<16x128xf32>
    %31 = arith.addf %28, %30 : vector<16x128xf32>
    %32 = arith.index_cast %8 : i32 to index
    %c0_15 = arith.constant 0 : index
    %33 = vector.load %arg7[%32, %c0_15] : memref<16x128xf32, #tpu.memory_space<vmem>>, vector<16x128xf32>
    tpu.vector_store %arg7[%32, %c0_15], %31 {strides = array<i32>} : memref<16x128xf32, #tpu.memory_space<vmem>>, vector<16x128xf32>,
    %c1_i32 = arith.constant 1 : i32
    return
  }
  func.func @transform_0(%arg0: i32) -> (i32, i32) {
    %c0_i32 = arith.constant 0 : i32
    %c0_i32_0 = arith.constant 0 : i32
    return %arg0, %c0_i32 : i32, i32
  }
  func.func @transform_1(%arg0: i32) -> (i32, i32) {
    %c0_i32 = arith.constant 0 : i32
    %c0_i32_0 = arith.constant 0 : i32
    %c0_i32_1 = arith.constant 0 : i32
    return %c0_i32, %c0_i32_0 : i32, i32
  }
  func.func @transform_2(%arg0: i32) -> (i32, i32) {
    %c0_i32 = arith.constant 0 : i32
    %c0_i32_0 = arith.constant 0 : i32
    %c0_i32_1 = arith.constant 0 : i32
    return %c0_i32, %c0_i32_0 : i32, i32
  }
  func.func @transform_3(%arg0: i32) -> (i32, i32) {
    %c0_i32 = arith.constant 0 : i32
    %c0_i32_0 = arith.constant 0 : i32
    %c0_i32_1 = arith.constant 0 : i32
    return %c0_i32, %c0_i32_0 : i32, i32
  }
  func.func @transform_4(%arg0: i32) -> (i32, i32) {
    %c0_i32 = arith.constant 0 : i32
    %c0_i32_0 = arith.constant 0 : i32
    %c0_i32_1 = arith.constant 0 : i32
    return %c0_i32, %c0_i32_0 : i32, i32
  }
  func.func @transform_5(%arg0: i32) -> (i32, i32) {
    %c0_i32 = arith.constant 0 : i32
    %c0_i32_0 = arith.constant 0 : i32
    %c0_i32_1 = arith.constant 0 : i32
    return %c0_i32, %c0_i32_0 : i32, i32
  }
  func.func @transform_6(%arg0: i32) -> (i32, i32) {
    %c0_i32 = arith.constant 0 : i32
    %c0_i32_0 = arith.constant 0 : i32
    return %arg0, %c0_i32 : i32, i32
  }
}

module attributes {stable_mosaic.version = 11 : i64} {
  func.func @_ke_kernel(%arg0: i32, %arg1: memref<16x128xf32, #tpu.memory_space<vmem>>, %arg2: memref<128x128xf32, #tpu.memory_space<vmem>>, %arg3: memref<128x128xf32, #tpu.memory_space<vmem>>, %arg4: memref<128x128xf32, #tpu.memory_space<vmem>>, %arg5: memref<128x128xf32, #tpu.memory_space<vmem>>, %arg6: memref<1x128xf32, #tpu.memory_space<vmem>>, %arg7: memref<16x128xf32, #tpu.memory_space<vmem>>) attributes {dimension_semantics = [#tpu.dimension_semantics<parallel>], iteration_bounds = array<i64: 1>, scalar_prefetch = 0 : i64, scratch_operands = 0 : i64, tpu.core_type = #tpu.core_type<tc>, window_params = [{transform_indices = @transform_0, window_bounds = array<i64: 16, 128>}, {pipeline_mode = #tpu.pipeline_mode<synchronous>, transform_indices = @transform_1, window_bounds = array<i64: 128, 128>}, {pipeline_mode = #tpu.pipeline_mode<synchronous>, transform_indices = @transform_2, window_bounds = array<i64: 128, 128>}, {pipeline_mode = #tpu.pipeline_mode<synchronous>, transform_indices = @transform_3, window_bounds = array<i64: 128, 128>}, {pipeline_mode = #tpu.pipeline_mode<synchronous>, transform_indices = @transform_4, window_bounds = array<i64: 128, 128>}, {pipeline_mode = #tpu.pipeline_mode<synchronous>, transform_indices = @transform_5, window_bounds = array<i64: 1, 128>}, {transform_indices = @transform_6, window_bounds = array<i64: 16, 128>}]} {
    %c0 = arith.constant 0 : index
    %c0_0 = arith.constant 0 : index
    %0 = vector.load %arg2[%c0, %c0_0] : memref<128x128xf32, #tpu.memory_space<vmem>>, vector<128x128xf32>
    %c0_1 = arith.constant 0 : index
    %c0_2 = arith.constant 0 : index
    %1 = vector.load %arg3[%c0_1, %c0_2] : memref<128x128xf32, #tpu.memory_space<vmem>>, vector<128x128xf32>
    %c0_3 = arith.constant 0 : index
    %c0_4 = arith.constant 0 : index
    %2 = vector.load %arg4[%c0_3, %c0_4] : memref<128x128xf32, #tpu.memory_space<vmem>>, vector<128x128xf32>
    %c0_5 = arith.constant 0 : index
    %c0_6 = arith.constant 0 : index
    %3 = vector.load %arg5[%c0_5, %c0_6] : memref<128x128xf32, #tpu.memory_space<vmem>>, vector<128x128xf32>
    %c0_7 = arith.constant 0 : index
    %c0_8 = arith.constant 0 : index
    %4 = vector.load %arg6[%c0_7, %c0_8] : memref<1x128xf32, #tpu.memory_space<vmem>>, vector<1x128xf32>
    %5 = vector.shape_cast %4 : vector<1x128xf32> to vector<1x128xf32>
    %6 = vector.broadcast %5 : vector<1x128xf32> to vector<16x128xf32>
    %c0_i32 = arith.constant 0 : i32
    %c16_i32 = arith.constant 16 : i32
    %7 = arith.muli %c0_i32, %c16_i32 : i32
    %8 = tpu.assume_multiple %7, 16 : i32
    %9 = arith.index_cast %8 : i32 to index
    %c0_9 = arith.constant 0 : index
    %10 = vector.load %arg1[%9, %c0_9] : memref<16x128xf32, #tpu.memory_space<vmem>>, vector<16x128xf32>
    %11 = math.absf %10 : vector<16x128xf32>
    %cst = arith.constant dense<0xFF800000> : vector<16xf32>
    %12 = vector.multi_reduction <maximumf>, %11, %cst [1] : vector<16x128xf32> to vector<16xf32>
    %13 = vector.shape_cast %12 : vector<16xf32> to vector<16x1xf32>
    %14 = vector.broadcast %13 : vector<16x1xf32> to vector<16x128xf32>
    %15 = arith.subf %10, %14 : vector<16x128xf32>
    %16 = math.exp %15 : vector<16x128xf32>
    %cst_10 = arith.constant 0.000000e+00 : f32
    %17 = vector.broadcast %cst_10 : f32 to vector<16x128xf32>
    %18 = arith.subf %17, %10 : vector<16x128xf32>
    %19 = vector.broadcast %13 : vector<16x1xf32> to vector<16x128xf32>
    %20 = arith.subf %18, %19 : vector<16x128xf32>
    %21 = math.exp %20 : vector<16x128xf32>
    %cst_11 = arith.constant dense<0.000000e+00> : vector<16x128xf32>
    %22 = tpu.matmul %16, %0, %cst_11 {dimension_numbers = #tpu.dot_dimension_numbers<[1], [0], [0], [1], [0, 0, 1, 1], [], []>} : vector<16x128xf32>, vector<128x128xf32>, vector<16x128xf32> -> vector<16x128xf32>
    %cst_12 = arith.constant dense<0.000000e+00> : vector<16x128xf32>
    %23 = tpu.matmul %21, %1, %cst_12 {dimension_numbers = #tpu.dot_dimension_numbers<[1], [0], [0], [1], [0, 0, 1, 1], [], []>} : vector<16x128xf32>, vector<128x128xf32>, vector<16x128xf32> -> vector<16x128xf32>
    %24 = arith.addf %22, %23 : vector<16x128xf32>
    %25 = arith.addf %24, %6 : vector<16x128xf32>
    %26 = tpu.reciprocal %25 : vector<16x128xf32> -> vector<16x128xf32>
    %cst_13 = arith.constant dense<0.000000e+00> : vector<16x128xf32>
    %27 = tpu.matmul %26, %2, %cst_13 {dimension_numbers = #tpu.dot_dimension_numbers<[1], [0], [0], [1], [0, 0, 1, 1], [], []>} : vector<16x128xf32>, vector<128x128xf32>, vector<16x128xf32> -> vector<16x128xf32>
    %28 = arith.mulf %16, %27 : vector<16x128xf32>
    %cst_14 = arith.constant dense<0.000000e+00> : vector<16x128xf32>
    %29 = tpu.matmul %26, %3, %cst_14 {dimension_numbers = #tpu.dot_dimension_numbers<[1], [0], [0], [1], [0, 0, 1, 1], [], []>} : vector<16x128xf32>, vector<128x128xf32>, vector<16x128xf32> -> vector<16x128xf32>
    %30 = arith.mulf %21, %29 : vector<16x128xf32>
    %31 = arith.addf %28, %30 : vector<16x128xf32>
    %32 = arith.index_cast %8 : i32 to index
    %c0_15 = arith.constant 0 : index
    %33 = vector.load %arg7[%32, %c0_15] : memref<16x128xf32, #tpu.memory_space<vmem>>, vector<16x128xf32>
    tpu.vector_store %arg7[%32, %c0_15], %31 {strides = array<i32>} : memref<16x128xf32, #tpu.memory_space<vmem>>, vector<16x128xf32>,
    %c1_i32 = arith.constant 1 : i32
    return
  }
  func.func @transform_0(%arg0: i32) -> (i32, i32) {
    %c0_i32 = arith.constant 0 : i32
    %c0_i32_0 = arith.constant 0 : i32
    return %arg0, %c0_i32 : i32, i32
  }
  func.func @transform_1(%arg0: i32) -> (i32, i32) {
    %c0_i32 = arith.constant 0 : i32
    %c0_i32_0 = arith.constant 0 : i32
    %c0_i32_1 = arith.constant 0 : i32
    return %c0_i32, %c0_i32_0 : i32, i32
  }
  func.func @transform_2(%arg0: i32) -> (i32, i32) {
    %c0_i32 = arith.constant 0 : i32
    %c0_i32_0 = arith.constant 0 : i32
    %c0_i32_1 = arith.constant 0 : i32
    return %c0_i32, %c0_i32_0 : i32, i32
  }
  func.func @transform_3(%arg0: i32) -> (i32, i32) {
    %c0_i32 = arith.constant 0 : i32
    %c0_i32_0 = arith.constant 0 : i32
    %c0_i32_1 = arith.constant 0 : i32
    return %c0_i32, %c0_i32_0 : i32, i32
  }
  func.func @transform_4(%arg0: i32) -> (i32, i32) {
    %c0_i32 = arith.constant 0 : i32
    %c0_i32_0 = arith.constant 0 : i32
    %c0_i32_1 = arith.constant 0 : i32
    return %c0_i32, %c0_i32_0 : i32, i32
  }
  func.func @transform_5(%arg0: i32) -> (i32, i32) {
    %c0_i32 = arith.constant 0 : i32
    %c0_i32_0 = arith.constant 0 : i32
    %c0_i32_1 = arith.constant 0 : i32
    return %c0_i32, %c0_i32_0 : i32, i32
  }
  func.func @transform_6(%arg0: i32) -> (i32, i32) {
    %c0_i32 = arith.constant 0 : i32
    %c0_i32_0 = arith.constant 0 : i32
    return %arg0, %c0_i32 : i32, i32
  }
}

</mosaic_0001>

<llo_original>
// kernel: tpu_custom_call.1
$region0: #{tpu_custom_call.1}
  #allocation0 [shape = 'u32[]', space=smem, size = 0x4, offset = 0x4, fixed_abs, tag = 'smem constant byte address 0x4 - core index']
  #allocation1 [shape = 'u32[144,128]{1,0:T(1,128)}', space=vmem, size = 0x12000, scoped, tag = 'internal scratch']
  %s0 = inlined_call_operand.hbm [shape: f32[16,128], index: 0, kind: input, shape index: {}]
  %s1 = inlined_call_operand.hbm [shape: f32[128,128], index: 1, kind: input, shape index: {}]
  %s2 = inlined_call_operand.hbm [shape: f32[128,128], index: 2, kind: input, shape index: {}]
  %s3 = inlined_call_operand.hbm [shape: f32[128,128], index: 3, kind: input, shape index: {}]
  %s4 = inlined_call_operand.hbm [shape: f32[128,128], index: 4, kind: input, shape index: {}]
  %s5 = inlined_call_operand.vmem [shape: f32[1,128], index: 5, kind: input, shape index: {}]
  %s6 = inlined_call_operand.hbm [shape: f32[16,128], index: 6, kind: output, shape index: {}]
  %s7 = sld [smem:[#allocation0]]
  $region54: #{tpu_custom_call.1} parent=0
    _
  %s9 = ssub.s32 1, %s7
  %s10 = scalar_select 0, %s9, %s7
  $region1: #{tpu_custom_call.1} parent=0
    #allocation2 [shape = 'u8[8192]{0}', space=vmem, size = 0x2000, scoped, tag = 'input window, operand 0, single buffered']
    #allocation3 [shape = 's32[1]{0}', space=sflag, size = 0x4, scoped, tag = 'scoped memory for tpu_custom_call.1']
    #allocation4 [shape = 's32[1]{0}', space=sflag, size = 0x4, scoped, tag = 'scoped memory for tpu_custom_call.1']
    #allocation5 [shape = 'u8[65536]{0}', space=vmem, size = 0x10000, scoped, tag = 'input window, operand 1, single buffered']
    #allocation6 [shape = 's32[1]{0}', space=sflag, size = 0x4, scoped, tag = 'scoped memory for tpu_custom_call.1']
    #allocation7 [shape = 'u8[65536]{0}', space=vmem, size = 0x10000, scoped, tag = 'input window, operand 2, single buffered']
    #allocation8 [shape = 'u8[65536]{0}', space=vmem, size = 0x10000, scoped, tag = 'input window, operand 3, single buffered']
    #allocation9 [shape = 's32[1]{0}', space=sflag, size = 0x4, scoped, tag = 'scoped memory for tpu_custom_call.1']
    #allocation10 [shape = 'u8[65536]{0}', space=vmem, size = 0x10000, scoped, tag = 'input window, operand 4, single buffered']
    #allocation11 [shape = 'u8[8192]{0}', space=vmem, size = 0x2000, scoped, tag = 'output window, operand 0, single buffered']
    %11 = vsyncpa [#allocation3], 0
    %12 = vsyncpa [#allocation6], 0
    %13 = vsyncpa [#allocation9], 0
    %14 = vsyncpa [#allocation4], 0
    // Predicated region
    $region2: #{tpu_custom_call.1} parent=1 // pred_check
      _
    $region3: #{tpu_custom_call.1} parent=1 // pred_check_branch
      %16 = sbr.rel (0) target = $region5
    $region4: #{tpu_custom_call.1} parent=1 // pred_region
      %s18 = ssub.s32 256, 256
      %19 = vsyncadd [#allocation3], %s18
      %s20 = sshll.u32 [#allocation2], 4
      %s21 = int_to_ptr.vmem [resolvable:$true] %s20
      %26 = dma.hbm_to_vmem [thread:$0]  %s0, 256, %s21, [#allocation3], 128, 128, 8
    $region5: #{tpu_custom_call.1} parent=1 // pred_fallthru
      _
    // Predicated region
    $region6: #{tpu_custom_call.1} parent=1 // pred_check
      _
    $region7: #{tpu_custom_call.1} parent=1 // pred_check_branch
      %28 = sbr.rel (0) target = $region9
    $region8: #{tpu_custom_call.1} parent=1 // pred_region
      %s30 = ssub.s32 2048, 2048
      %31 = vsyncadd [#allocation6], %s30
      %s32 = sshll.u32 [#allocation5], 4
      %s33 = int_to_ptr.vmem [resolvable:$true] %s32
      %38 = dma.hbm_to_vmem [thread:$0]  %s1, 2048, %s33, [#allocation6], 128, 128, 8
    $region9: #{tpu_custom_call.1} parent=1 // pred_fallthru
      _
    // Predicated region
    $region10: #{tpu_custom_call.1} parent=1 // pred_check
      _
    $region11: #{tpu_custom_call.1} parent=1 // pred_check_branch
      %40 = sbr.rel (0) target = $region13
    $region12: #{tpu_custom_call.1} parent=1 // pred_region
      %s42 = ssub.s32 2048, 2048
      %43 = vsyncadd [#allocation6], %s42
      %s44 = sshll.u32 [#allocation7], 4
      %s45 = int_to_ptr.vmem [resolvable:$true] %s44
      %50 = dma.hbm_to_vmem [thread:$0]  %s2, 2048, %s45, [#allocation6], 128, 128, 8
    $region13: #{tpu_custom_call.1} parent=1 // pred_fallthru
      _
    // Predicated region
    $region14: #{tpu_custom_call.1} parent=1 // pred_check
      _
    $region15: #{tpu_custom_call.1} parent=1 // pred_check_branch
      %52 = sbr.rel (0) target = $region17
    $region16: #{tpu_custom_call.1} parent=1 // pred_region
      %s54 = ssub.s32 2048, 2048
      %55 = vsyncadd [#allocation9], %s54
      %s56 = sshll.u32 [#allocation8], 4
      %s57 = int_to_ptr.vmem [resolvable:$true] %s56
      %62 = dma.hbm_to_vmem [thread:$0]  %s3, 2048, %s57, [#allocation9], 128, 128, 8
    $region17: #{tpu_custom_call.1} parent=1 // pred_fallthru
      _
    // Predicated region
    $region18: #{tpu_custom_call.1} parent=1 // pred_check
      _
    $region19: #{tpu_custom_call.1} parent=1 // pred_check_branch
      %64 = sbr.rel (0) target = $region21
    $region20: #{tpu_custom_call.1} parent=1 // pred_region
      %s66 = ssub.s32 2048, 2048
      %67 = vsyncadd [#allocation9], %s66
      %s68 = sshll.u32 [#allocation10], 4
      %s69 = int_to_ptr.vmem [resolvable:$true] %s68
      %74 = dma.hbm_to_vmem [thread:$0]  %s4, 2048, %s69, [#allocation9], 128, 128, 8
    $region21: #{tpu_custom_call.1} parent=1 // pred_fallthru
      _
    // Predicated region
    $region22: #{tpu_custom_call.1} parent=1 // pred_check
      _
    $region23: #{tpu_custom_call.1} parent=1 // pred_check_branch
      %76 = sbr.rel (0) target = $region25
    $region24: #{tpu_custom_call.1} parent=1 // pred_region
      _
    $region25: #{tpu_custom_call.1} parent=1 // pred_fallthru
      _
    // Predicated region
    $region26: #{tpu_custom_call.1} parent=1 // pred_check
      _
    $region27: #{tpu_custom_call.1} parent=1 // pred_check_branch
      %78 = sbr.rel (0) target = $region29
    $region28: #{tpu_custom_call.1} parent=1 // pred_region
      %79 = dma.done [#allocation3], 256
    $region29: #{tpu_custom_call.1} parent=1 // pred_fallthru
      _
    // Predicated region
    $region30: #{tpu_custom_call.1} parent=1 // pred_check
      _
    $region31: #{tpu_custom_call.1} parent=1 // pred_check_branch
      %81 = sbr.rel (0) target = $region33
    $region32: #{tpu_custom_call.1} parent=1 // pred_region
      %82 = dma.done [#allocation6], 2048
    $region33: #{tpu_custom_call.1} parent=1 // pred_fallthru
      _
    // Predicated region
    $region34: #{tpu_custom_call.1} parent=1 // pred_check
      _
    $region35: #{tpu_custom_call.1} parent=1 // pred_check_branch
      %84 = sbr.rel (0) target = $region37
    $region36: #{tpu_custom_call.1} parent=1 // pred_region
      %85 = dma.done [#allocation6], 2048
    $region37: #{tpu_custom_call.1} parent=1 // pred_fallthru
      _
    // Predicated region
    $region38: #{tpu_custom_call.1} parent=1 // pred_check
      _
    $region39: #{tpu_custom_call.1} parent=1 // pred_check_branch
      %87 = sbr.rel (0) target = $region41
    $region40: #{tpu_custom_call.1} parent=1 // pred_region
      %88 = dma.done [#allocation9], 2048
    $region41: #{tpu_custom_call.1} parent=1 // pred_fallthru
      _
    // Predicated region
    $region42: #{tpu_custom_call.1} parent=1 // pred_check
      _
    $region43: #{tpu_custom_call.1} parent=1 // pred_check_branch
      %90 = sbr.rel (0) target = $region45
    $region44: #{tpu_custom_call.1} parent=1 // pred_region
      %91 = dma.done [#allocation9], 2048
    $region45: #{tpu_custom_call.1} parent=1 // pred_fallthru
      _
    %v92 = vld [vmem:[#allocation5] sm:$0xff]
    %v93 = vld [vmem:[#allocation5 + $0x8] sm:$0xff]
    %v94 = vld [vmem:[#allocation5 + $0x10] sm:$0xff]
    %v95 = vld [vmem:[#allocation5 + $0x18] sm:$0xff]
    %v96 = vld [vmem:[#allocation5 + $0x20] sm:$0xff]
    %v97 = vld [vmem:[#allocation5 + $0x28] sm:$0xff]
    %v98 = vld [vmem:[#allocation5 + $0x30] sm:$0xff]
    %v99 = vld [vmem:[#allocation5 + $0x38] sm:$0xff]
    %v100 = vld [vmem:[#allocation5 + $0x40] sm:$0xff]
    %v101 = vld [vmem:[#allocation5 + $0x48] sm:$0xff]
    %v102 = vld [vmem:[#allocation5 + $0x50] sm:$0xff]
    %v103 = vld [vmem:[#allocation5 + $0x58] sm:$0xff]
    %v104 = vld [vmem:[#allocation5 + $0x60] sm:$0xff]
    %v105 = vld [vmem:[#allocation5 + $0x68] sm:$0xff]
    %v106 = vld [vmem:[#allocation5 + $0x70] sm:$0xff]
    %v107 = vld [vmem:[#allocation5 + $0x78] sm:$0xff]
    %v108 = vld [vmem:[#allocation7] sm:$0xff]
    %v109 = vld [vmem:[#allocation7 + $0x8] sm:$0xff]
    %v110 = vld [vmem:[#allocation7 + $0x10] sm:$0xff]
    %v111 = vld [vmem:[#allocation7 + $0x18] sm:$0xff]
    %v112 = vld [vmem:[#allocation7 + $0x20] sm:$0xff]
    %v113 = vld [vmem:[#allocation7 + $0x28] sm:$0xff]
    %v114 = vld [vmem:[#allocation7 + $0x30] sm:$0xff]
    %v115 = vld [vmem:[#allocation7 + $0x38] sm:$0xff]
    %v116 = vld [vmem:[#allocation7 + $0x40] sm:$0xff]
    %v117 = vld [vmem:[#allocation7 + $0x48] sm:$0xff]
    %v118 = vld [vmem:[#allocation7 + $0x50] sm:$0xff]
    %v119 = vld [vmem:[#allocation7 + $0x58] sm:$0xff]
    %v120 = vld [vmem:[#allocation7 + $0x60] sm:$0xff]
    %v121 = vld [vmem:[#allocation7 + $0x68] sm:$0xff]
    %v122 = vld [vmem:[#allocation7 + $0x70] sm:$0xff]
    %v123 = vld [vmem:[#allocation7 + $0x78] sm:$0xff]
    %v124 = vld [vmem:[#allocation8] sm:$0xff]
    %v125 = vld [vmem:[#allocation8 + $0x8] sm:$0xff]
    %v126 = vld [vmem:[#allocation8 + $0x10] sm:$0xff]
    %v127 = vld [vmem:[#allocation8 + $0x18] sm:$0xff]
    %v128 = vld [vmem:[#allocation8 + $0x20] sm:$0xff]
    %v129 = vld [vmem:[#allocation8 + $0x28] sm:$0xff]
    %v130 = vld [vmem:[#allocation8 + $0x30] sm:$0xff]
    %v131 = vld [vmem:[#allocation8 + $0x38] sm:$0xff]
    %v132 = vld [vmem:[#allocation8 + $0x40] sm:$0xff]
    %v133 = vld [vmem:[#allocation8 + $0x48] sm:$0xff]
    %v134 = vld [vmem:[#allocation8 + $0x50] sm:$0xff]
    %v135 = vld [vmem:[#allocation8 + $0x58] sm:$0xff]
    %v136 = vld [vmem:[#allocation8 + $0x60] sm:$0xff]
    %v137 = vld [vmem:[#allocation8 + $0x68] sm:$0xff]
    %v138 = vld [vmem:[#allocation8 + $0x70] sm:$0xff]
    %v139 = vld [vmem:[#allocation8 + $0x78] sm:$0xff]
    %v140 = vld [vmem:[#allocation10] sm:$0xff]
    %v141 = vld [vmem:[#allocation10 + $0x8] sm:$0xff]
    %v142 = vld [vmem:[#allocation10 + $0x10] sm:$0xff]
    %v143 = vld [vmem:[#allocation10 + $0x18] sm:$0xff]
    %v144 = vld [vmem:[#allocation10 + $0x20] sm:$0xff]
    %v145 = vld [vmem:[#allocation10 + $0x28] sm:$0xff]
    %v146 = vld [vmem:[#allocation10 + $0x30] sm:$0xff]
    %v147 = vld [vmem:[#allocation10 + $0x38] sm:$0xff]
    %v148 = vld [vmem:[#allocation10 + $0x40] sm:$0xff]
    %v149 = vld [vmem:[#allocation10 + $0x48] sm:$0xff]
    %v150 = vld [vmem:[#allocation10 + $0x50] sm:$0xff]
    %v151 = vld [vmem:[#allocation10 + $0x58] sm:$0xff]
    %v152 = vld [vmem:[#allocation10 + $0x60] sm:$0xff]
    %v153 = vld [vmem:[#allocation10 + $0x68] sm:$0xff]
    %v154 = vld [vmem:[#allocation10 + $0x70] sm:$0xff]
    %v155 = vld [vmem:[#allocation10 + $0x78] sm:$0xff]
    %v156 = vld [vmem:[%s5] sm:$0x1]
    %v158 = vlaneseq
    %v159 = vshrl.u32 %v158, 7
    %v160 = vsub.s32 0, %v159
    %v161 = vrot.slane %v156, %v160
    %v163 = vld [vmem:[#allocation2] sm:$0xff]
    %v164 = vld [vmem:[#allocation2 + $0x8] sm:$0xff]
    %v165 = vand.u32 2147483647, %v163
    %v166 = vand.u32 2147483647, %v164
    %167 = vmax.xlane.f32.xlu0 %v165
    %v168 = vpop.xlane.xlu0 %167
    %169 = vmax.xlane.f32.xlu0 %v166
    %v170 = vpop.xlane.xlu0 %169
    %v171 = vsub.f32 %v163, %v168
    %v172 = vsub.f32 %v164, %v170
    %v173 = vmul.f32 %v171, 1.442695
    %v174 = vpow.pop %v173
    %v175 = vmul.f32 %v172, 1.442695
    %v176 = vpow.pop %v175
    %v177 = vsub.f32 0.0, %v163
    %v178 = vsub.f32 0.0, %v164
    %v179 = vsub.f32 %v177, %v168
    %v180 = vsub.f32 %v178, %v170
    %v181 = vmul.f32 %v179, 1.442695
    %v182 = vpow.pop %v181
    %v183 = vmul.f32 %v180, 1.442695
    %v184 = vpow.pop %v183
    %185 = vmatprep.subr.mxu0 0.0
    %186 = vmatpush1.msra.mxu0 %v108
    %187 = vmatprep.subr.mxu0 0.0
    %188 = vmatpush1.msra.mxu0 %v109
    %189 = vmatprep.subr.mxu0 0.0
    %190 = vmatpush1.msra.mxu0 %v110
    %191 = vmatprep.subr.mxu0 0.0
    %192 = vmatpush1.msra.mxu0 %v111
    %193 = vmatprep.subr.mxu0 0.0
    %194 = vmatpush1.msra.mxu0 %v112
    %195 = vmatprep.subr.mxu0 0.0
    %196 = vmatpush1.msra.mxu0 %v113
    %197 = vmatprep.subr.mxu0 0.0
    %198 = vmatpush1.msra.mxu0 %v114
    %199 = vmatprep.subr.mxu0 0.0
    %200 = vmatpush1.msra.mxu0 %v115
    %201 = vmatprep.subr.mxu0 0.0
    %202 = vmatpush1.msra.mxu0 %v116
    %203 = vmatprep.subr.mxu0 0.0
    %204 = vmatpush1.msra.mxu0 %v117
    %205 = vmatprep.subr.mxu0 0.0
    %206 = vmatpush1.msra.mxu0 %v118
    %207 = vmatprep.subr.mxu0 0.0
    %208 = vmatpush1.msra.mxu0 %v119
    %209 = vmatprep.subr.mxu0 0.0
    %210 = vmatpush1.msra.mxu0 %v120
    %211 = vmatprep.subr.mxu0 0.0
    %212 = vmatpush1.msra.mxu0 %v121
    %213 = vmatprep.subr.mxu0 0.0
    %214 = vmatpush1.msra.mxu0 %v122
    %215 = vmatprep.subr.mxu0 0.0
    %216 = vmatpush1.msra.mxu0 %v123
    %217 = vmatprep.subr.mxu0 0.0
    %218 = vmatpush1.msra.mxu0 0.0
    %219 = vmatprep.subr.mxu0 0.0
    %220 = vmatpush1.msra.mxu0 0.0
    %221 = vmatprep.subr.mxu0 0.0
    %222 = vmatpush1.msra.mxu0 0.0
    %223 = vmatprep.subr.mxu0 0.0
    %224 = vmatpush1.msra.mxu0 0.0
    %225 = vmatprep.subr.mxu0 0.0
    %226 = vmatpush1.msra.mxu0 0.0
    %227 = vmatprep.subr.mxu0 0.0
    %228 = vmatpush1.msra.mxu0 0.0
    %229 = vmatprep.subr.mxu0 0.0
    %230 = vmatpush1.msra.mxu0 0.0
    %231 = vmatprep.subr.mxu0 0.0
    %232 = vmatpush1.msra.mxu0 0.0
    %233 = vmatprep.subr.mxu0 0.0
    %234 = vmatpush1.msra.mxu0 0.0
    %235 = vmatprep.subr.mxu0 0.0
    %236 = vmatpush1.msra.mxu0 0.0
    %237 = vmatprep.subr.mxu0 0.0
    %238 = vmatpush1.msra.mxu0 0.0
    %239 = vmatprep.subr.mxu0 0.0
    %240 = vmatpush1.msra.mxu0 0.0
    %241 = vmatprep.subr.mxu0 0.0
    %242 = vmatpush1.msra.mxu0 0.0
    %243 = vmatprep.subr.mxu0 0.0
    %244 = vmatpush1.msra.mxu0 0.0
    %245 = vmatprep.subr.mxu0 0.0
    %246 = vmatpush1.msra.mxu0 0.0
    %247 = vmatprep.subr.mxu0 0.0
    %248 = vmatpush1.msra.mxu0 0.0
    %249 = vmatprep.mubr.f32.mxu0 0.0
    %250 = vmatmul.mubr.f32.gmra.mrb[0].mxu0 %v182
    %v251 = vpop.f32.mrb[0].mxu0
    %v252 = vadd.f32 0.0, %v251
    %v253 = vpop.f32.mrb[0].mxu0
    %254 = vmatprep.mubr.f32.mxu0 0.0
    %255 = vmatmul.mubr.f32.gmra.mrb[0].mxu0 %v184
    %v256 = vpop.f32.mrb[0].mxu0
    %v257 = vadd.f32 0.0, %v256
    %v258 = vpop.f32.mrb[0].mxu0
    %259 = vdwg.mxu0
    %260 = vmatprep.subr.mxu0 0.0
    %261 = vmatpush1.msra.mxu0 %v92
    %262 = vmatprep.subr.mxu0 0.0
    %263 = vmatpush1.msra.mxu0 %v93
    %264 = vmatprep.subr.mxu0 0.0
    %265 = vmatpush1.msra.mxu0 %v94
    %266 = vmatprep.subr.mxu0 0.0
    %267 = vmatpush1.msra.mxu0 %v95
    %268 = vmatprep.subr.mxu0 0.0
    %269 = vmatpush1.msra.mxu0 %v96
    %270 = vmatprep.subr.mxu0 0.0
    %271 = vmatpush1.msra.mxu0 %v97
    %272 = vmatprep.subr.mxu0 0.0
    %273 = vmatpush1.msra.mxu0 %v98
    %274 = vmatprep.subr.mxu0 0.0
    %275 = vmatpush1.msra.mxu0 %v99
    %276 = vmatprep.subr.mxu0 0.0
    %277 = vmatpush1.msra.mxu0 %v100
    %278 = vmatprep.subr.mxu0 0.0
    %279 = vmatpush1.msra.mxu0 %v101
    %280 = vmatprep.subr.mxu0 0.0
    %281 = vmatpush1.msra.mxu0 %v102
    %282 = vmatprep.subr.mxu0 0.0
    %283 = vmatpush1.msra.mxu0 %v103
    %284 = vmatprep.subr.mxu0 0.0
    %285 = vmatpush1.msra.mxu0 %v104
    %286 = vmatprep.subr.mxu0 0.0
    %287 = vmatpush1.msra.mxu0 %v105
    %288 = vmatprep.subr.mxu0 0.0
    %289 = vmatpush1.msra.mxu0 %v106
    %290 = vmatprep.subr.mxu0 0.0
    %291 = vmatpush1.msra.mxu0 %v107
    %292 = vmatprep.subr.mxu0 0.0
    %293 = vmatpush1.msra.mxu0 0.0
    %294 = vmatprep.subr.mxu0 0.0
    %295 = vmatpush1.msra.mxu0 0.0
    %296 = vmatprep.subr.mxu0 0.0
    %297 = vmatpush1.msra.mxu0 0.0
    %298 = vmatprep.subr.mxu0 0.0
    %299 = vmatpush1.msra.mxu0 0.0
    %300 = vmatprep.subr.mxu0 0.0
    %301 = vmatpush1.msra.mxu0 0.0
    %302 = vmatprep.subr.mxu0 0.0
    %303 = vmatpush1.msra.mxu0 0.0
    %304 = vmatprep.subr.mxu0 0.0
    %305 = vmatpush1.msra.mxu0 0.0
    %306 = vmatprep.subr.mxu0 0.0
    %307 = vmatpush1.msra.mxu0 0.0
    %308 = vmatprep.subr.mxu0 0.0
    %309 = vmatpush1.msra.mxu0 0.0
    %310 = vmatprep.subr.mxu0 0.0
    %311 = vmatpush1.msra.mxu0 0.0
    %312 = vmatprep.subr.mxu0 0.0
    %313 = vmatpush1.msra.mxu0 0.0
    %314 = vmatprep.subr.mxu0 0.0
    %315 = vmatpush1.msra.mxu0 0.0
    %316 = vmatprep.subr.mxu0 0.0
    %317 = vmatpush1.msra.mxu0 0.0
    %318 = vmatprep.subr.mxu0 0.0
    %319 = vmatpush1.msra.mxu0 0.0
    %320 = vmatprep.subr.mxu0 0.0
    %321 = vmatpush1.msra.mxu0 0.0
    %322 = vmatprep.subr.mxu0 0.0
    %323 = vmatpush1.msra.mxu0 0.0
    %324 = vmatprep.mubr.f32.mxu0 0.0
    %325 = vmatmul.mubr.f32.gmra.mrb[0].mxu0 %v174
    %v326 = vpop.f32.mrb[0].mxu0
    %v327 = vadd.f32 %v252, %v326
    %v328 = vpop.f32.mrb[0].mxu0
    %329 = vmatprep.mubr.f32.mxu0 0.0
    %330 = vmatmul.mubr.f32.gmra.mrb[0].mxu0 %v176
    %v331 = vpop.f32.mrb[0].mxu0
    %v332 = vadd.f32 %v257, %v331
    %v333 = vpop.f32.mrb[0].mxu0
    %334 = vdwg.mxu0
    %v335 = vadd.f32 %v327, %v161
    %v336 = vadd.f32 %v332, %v161
    %v337 = vrcp.pop %v335
    %v338 = vrcp.pop %v336
    %339 = vmatprep.subr.mxu0 0.0
    %340 = vmatpush1.msra.mxu0 %v124
    %341 = vmatprep.subr.mxu0 0.0
    %342 = vmatpush1.msra.mxu0 %v125
    %343 = vmatprep.subr.mxu0 0.0
    %344 = vmatpush1.msra.mxu0 %v126
    %345 = vmatprep.subr.mxu0 0.0
    %346 = vmatpush1.msra.mxu0 %v127
    %347 = vmatprep.subr.mxu0 0.0
    %348 = vmatpush1.msra.mxu0 %v128
    %349 = vmatprep.subr.mxu0 0.0
    %350 = vmatpush1.msra.mxu0 %v129
    %351 = vmatprep.subr.mxu0 0.0
    %352 = vmatpush1.msra.mxu0 %v130
    %353 = vmatprep.subr.mxu0 0.0
    %354 = vmatpush1.msra.mxu0 %v131
    %355 = vmatprep.subr.mxu0 0.0
    %356 = vmatpush1.msra.mxu0 %v132
    %357 = vmatprep.subr.mxu0 0.0
    %358 = vmatpush1.msra.mxu0 %v133
    %359 = vmatprep.subr.mxu0 0.0
    %360 = vmatpush1.msra.mxu0 %v134
    %361 = vmatprep.subr.mxu0 0.0
    %362 = vmatpush1.msra.mxu0 %v135
    %363 = vmatprep.subr.mxu0 0.0
    %364 = vmatpush1.msra.mxu0 %v136
    %365 = vmatprep.subr.mxu0 0.0
    %366 = vmatpush1.msra.mxu0 %v137
    %367 = vmatprep.subr.mxu0 0.0
    %368 = vmatpush1.msra.mxu0 %v138
    %369 = vmatprep.subr.mxu0 0.0
    %370 = vmatpush1.msra.mxu0 %v139
    %371 = vmatprep.subr.mxu0 0.0
    %372 = vmatpush1.msra.mxu0 0.0
    %373 = vmatprep.subr.mxu0 0.0
    %374 = vmatpush1.msra.mxu0 0.0
    %375 = vmatprep.subr.mxu0 0.0
    %376 = vmatpush1.msra.mxu0 0.0
    %377 = vmatprep.subr.mxu0 0.0
    %378 = vmatpush1.msra.mxu0 0.0
    %379 = vmatprep.subr.mxu0 0.0
    %380 = vmatpush1.msra.mxu0 0.0
    %381 = vmatprep.subr.mxu0 0.0
    %382 = vmatpush1.msra.mxu0 0.0
    %383 = vmatprep.subr.mxu0 0.0
    %384 = vmatpush1.msra.mxu0 0.0
    %385 = vmatprep.subr.mxu0 0.0
    %386 = vmatpush1.msra.mxu0 0.0
    %387 = vmatprep.subr.mxu0 0.0
    %388 = vmatpush1.msra.mxu0 0.0
    %389 = vmatprep.subr.mxu0 0.0
    %390 = vmatpush1.msra.mxu0 0.0
    %391 = vmatprep.subr.mxu0 0.0
    %392 = vmatpush1.msra.mxu0 0.0
    %393 = vmatprep.subr.mxu0 0.0
    %394 = vmatpush1.msra.mxu0 0.0
    %395 = vmatprep.subr.mxu0 0.0
    %396 = vmatpush1.msra.mxu0 0.0
    %397 = vmatprep.subr.mxu0 0.0
    %398 = vmatpush1.msra.mxu0 0.0
    %399 = vmatprep.subr.mxu0 0.0
    %400 = vmatpush1.msra.mxu0 0.0
    %401 = vmatprep.subr.mxu0 0.0
    %402 = vmatpush1.msra.mxu0 0.0
    %403 = vmatprep.mubr.f32.mxu0 0.0
    %404 = vmatmul.mubr.f32.gmra.mrb[0].mxu0 %v337
    %v405 = vpop.f32.mrb[0].mxu0
    %v406 = vadd.f32 0.0, %v405
    %v407 = vpop.f32.mrb[0].mxu0
    %408 = vmatprep.mubr.f32.mxu0 0.0
    %409 = vmatmul.mubr.f32.gmra.mrb[0].mxu0 %v338
    %v410 = vpop.f32.mrb[0].mxu0
    %v411 = vadd.f32 0.0, %v410
    %v412 = vpop.f32.mrb[0].mxu0
    %413 = vdwg.mxu0
    %v414 = vmul.f32 %v174, %v406
    %v415 = vmul.f32 %v176, %v411
    %416 = vmatprep.subr.mxu0 0.0
    %417 = vmatpush1.msra.mxu0 %v140
    %418 = vmatprep.subr.mxu0 0.0
    %419 = vmatpush1.msra.mxu0 %v141
    %420 = vmatprep.subr.mxu0 0.0
    %421 = vmatpush1.msra.mxu0 %v142
    %422 = vmatprep.subr.mxu0 0.0
    %423 = vmatpush1.msra.mxu0 %v143
    %424 = vmatprep.subr.mxu0 0.0
    %425 = vmatpush1.msra.mxu0 %v144
    %426 = vmatprep.subr.mxu0 0.0
    %427 = vmatpush1.msra.mxu0 %v145
    %428 = vmatprep.subr.mxu0 0.0
    %429 = vmatpush1.msra.mxu0 %v146
    %430 = vmatprep.subr.mxu0 0.0
    %431 = vmatpush1.msra.mxu0 %v147
    %432 = vmatprep.subr.mxu0 0.0
    %433 = vmatpush1.msra.mxu0 %v148
    %434 = vmatprep.subr.mxu0 0.0
    %435 = vmatpush1.msra.mxu0 %v149
    %436 = vmatprep.subr.mxu0 0.0
    %437 = vmatpush1.msra.mxu0 %v150
    %438 = vmatprep.subr.mxu0 0.0
    %439 = vmatpush1.msra.mxu0 %v151
    %440 = vmatprep.subr.mxu0 0.0
    %441 = vmatpush1.msra.mxu0 %v152
    %442 = vmatprep.subr.mxu0 0.0
    %443 = vmatpush1.msra.mxu0 %v153
    %444 = vmatprep.subr.mxu0 0.0
    %445 = vmatpush1.msra.mxu0 %v154
    %446 = vmatprep.subr.mxu0 0.0
    %447 = vmatpush1.msra.mxu0 %v155
    %448 = vmatprep.subr.mxu0 0.0
    %449 = vmatpush1.msra.mxu0 0.0
    %450 = vmatprep.subr.mxu0 0.0
    %451 = vmatpush1.msra.mxu0 0.0
    %452 = vmatprep.subr.mxu0 0.0
    %453 = vmatpush1.msra.mxu0 0.0
    %454 = vmatprep.subr.mxu0 0.0
    %455 = vmatpush1.msra.mxu0 0.0
    %456 = vmatprep.subr.mxu0 0.0
    %457 = vmatpush1.msra.mxu0 0.0
    %458 = vmatprep.subr.mxu0 0.0
    %459 = vmatpush1.msra.mxu0 0.0
    %460 = vmatprep.subr.mxu0 0.0
    %461 = vmatpush1.msra.mxu0 0.0
    %462 = vmatprep.subr.mxu0 0.0
    %463 = vmatpush1.msra.mxu0 0.0
    %464 = vmatprep.subr.mxu0 0.0
    %465 = vmatpush1.msra.mxu0 0.0
    %466 = vmatprep.subr.mxu0 0.0
    %467 = vmatpush1.msra.mxu0 0.0
    %468 = vmatprep.subr.mxu0 0.0
    %469 = vmatpush1.msra.mxu0 0.0
    %470 = vmatprep.subr.mxu0 0.0
    %471 = vmatpush1.msra.mxu0 0.0
    %472 = vmatprep.subr.mxu0 0.0
    %473 = vmatpush1.msra.mxu0 0.0
    %474 = vmatprep.subr.mxu0 0.0
    %475 = vmatpush1.msra.mxu0 0.0
    %476 = vmatprep.subr.mxu0 0.0
    %477 = vmatpush1.msra.mxu0 0.0
    %478 = vmatprep.subr.mxu0 0.0
    %479 = vmatpush1.msra.mxu0 0.0
    %480 = vmatprep.mubr.f32.mxu0 0.0
    %481 = vmatmul.mubr.f32.gmra.mrb[0].mxu0 %v337
    %v482 = vpop.f32.mrb[0].mxu0
    %v483 = vadd.f32 0.0, %v482
    %v484 = vpop.f32.mrb[0].mxu0
    %485 = vmatprep.mubr.f32.mxu0 0.0
    %486 = vmatmul.mubr.f32.gmra.mrb[0].mxu0 %v338
    %v487 = vpop.f32.mrb[0].mxu0
    %v488 = vadd.f32 0.0, %v487
    %v489 = vpop.f32.mrb[0].mxu0
    %490 = vdwg.mxu0
    %v491 = vmul.f32 %v182, %v483
    %v492 = vmul.f32 %v184, %v488
    %v493 = vadd.f32 %v414, %v491
    %v494 = vadd.f32 %v415, %v492
    %495 = vst [vmem:[#allocation11] sm:$0xff] %v493
    %496 = vst [vmem:[#allocation11 + $0x8] sm:$0xff] %v494
    // Predicated region
    $region46: #{tpu_custom_call.1} parent=1 // pred_check
      _
    $region47: #{tpu_custom_call.1} parent=1 // pred_check_branch
      %498 = sbr.rel (0) target = $region49
    $region48: #{tpu_custom_call.1} parent=1 // pred_region
      %s500 = ssub.s32 256, 256
      %501 = vsyncadd [#allocation4], %s500
      %s502 = sshll.u32 [#allocation11], 4
      %s503 = int_to_ptr.vmem [resolvable:$true] %s502
      %508 = dma.vmem_to_hbm [thread:$0]  %s503, 256, %s6, [#allocation4], 128, 128, 8
    $region49: #{tpu_custom_call.1} parent=1 // pred_fallthru
      _
    // Predicated region
    $region50: #{tpu_custom_call.1} parent=1 // pred_check
      _
    $region51: #{tpu_custom_call.1} parent=1 // pred_check_branch
      %510 = sbr.rel (0) target = $region53
    $region52: #{tpu_custom_call.1} parent=1 // pred_region
      %511 = dma.done [#allocation4], 256
    $region53: #{tpu_custom_call.1} parent=1 // pred_fallthru
      _
    %512 = vsyncpa [#allocation3], 1
    %513 = vsyncpa [#allocation6], 1
    %514 = vsyncpa [#allocation9], 1
    %515 = vsyncpa [#allocation4], 1

// kernel: tpu_custom_call.1
$region0: #{tpu_custom_call.1}
  #allocation0 [shape = 'u32[]', space=smem, size = 0x4, offset = 0x4, fixed_abs, tag = 'smem constant byte address 0x4 - core index']
  #allocation1 [shape = 'u32[144,128]{1,0:T(1,128)}', space=vmem, size = 0x12000, scoped, tag = 'internal scratch']
  %s0 = inlined_call_operand.hbm [shape: f32[16,128], index: 0, kind: input, shape index: {}]
  %s1 = inlined_call_operand.hbm [shape: f32[128,128], index: 1, kind: input, shape index: {}]
  %s2 = inlined_call_operand.hbm [shape: f32[128,128], index: 2, kind: input, shape index: {}]
  %s3 = inlined_call_operand.hbm [shape: f32[128,128], index: 3, kind: input, shape index: {}]
  %s4 = inlined_call_operand.hbm [shape: f32[128,128], index: 4, kind: input, shape index: {}]
  %s5 = inlined_call_operand.vmem [shape: f32[1,128], index: 5, kind: input, shape index: {}]
  %s6 = inlined_call_operand.hbm [shape: f32[16,128], index: 6, kind: output, shape index: {}]
  %s7 = sld [smem:[#allocation0]]
  $region54: #{tpu_custom_call.1} parent=0
    _
  %s9 = ssub.s32 1, %s7
  %s10 = scalar_select 0, %s9, %s7
  $region1: #{tpu_custom_call.1} parent=0
    #allocation2 [shape = 'u8[8192]{0}', space=vmem, size = 0x2000, scoped, tag = 'input window, operand 0, single buffered']
    #allocation3 [shape = 's32[1]{0}', space=sflag, size = 0x4, scoped, tag = 'scoped memory for tpu_custom_call.1']
    #allocation4 [shape = 's32[1]{0}', space=sflag, size = 0x4, scoped, tag = 'scoped memory for tpu_custom_call.1']
    #allocation5 [shape = 'u8[65536]{0}', space=vmem, size = 0x10000, scoped, tag = 'input window, operand 1, single buffered']
    #allocation6 [shape = 's32[1]{0}', space=sflag, size = 0x4, scoped, tag = 'scoped memory for tpu_custom_call.1']
    #allocation7 [shape = 'u8[65536]{0}', space=vmem, size = 0x10000, scoped, tag = 'input window, operand 2, single buffered']
    #allocation8 [shape = 'u8[65536]{0}', space=vmem, size = 0x10000, scoped, tag = 'input window, operand 3, single buffered']
    #allocation9 [shape = 's32[1]{0}', space=sflag, size = 0x4, scoped, tag = 'scoped memory for tpu_custom_call.1']
    #allocation10 [shape = 'u8[65536]{0}', space=vmem, size = 0x10000, scoped, tag = 'input window, operand 4, single buffered']
    #allocation11 [shape = 'u8[8192]{0}', space=vmem, size = 0x2000, scoped, tag = 'output window, operand 0, single buffered']
    %11 = vsyncpa [#allocation3], 0
    %12 = vsyncpa [#allocation6], 0
    %13 = vsyncpa [#allocation9], 0
    %14 = vsyncpa [#allocation4], 0
    // Predicated region
    $region2: #{tpu_custom_call.1} parent=1 // pred_check
      _
    $region3: #{tpu_custom_call.1} parent=1 // pred_check_branch
      %16 = sbr.rel (0) target = $region5
    $region4: #{tpu_custom_call.1} parent=1 // pred_region
      %s18 = ssub.s32 256, 256
      %19 = vsyncadd [#allocation3], %s18
      %s20 = sshll.u32 [#allocation2], 4
      %s21 = int_to_ptr.vmem [resolvable:$true] %s20
      %26 = dma.hbm_to_vmem [thread:$0]  %s0, 256, %s21, [#allocation3], 128, 128, 8
    $region5: #{tpu_custom_call.1} parent=1 // pred_fallthru
      _
    // Predicated region
    $region6: #{tpu_custom_call.1} parent=1 // pred_check
      _
    $region7: #{tpu_custom_call.1} parent=1 // pred_check_branch
      %28 = sbr.rel (0) target = $region9
    $region8: #{tpu_custom_call.1} parent=1 // pred_region
      %s30 = ssub.s32 2048, 2048
      %31 = vsyncadd [#allocation6], %s30
      %s32 = sshll.u32 [#allocation5], 4
      %s33 = int_to_ptr.vmem [resolvable:$true] %s32
      %38 = dma.hbm_to_vmem [thread:$0]  %s1, 2048, %s33, [#allocation6], 128, 128, 8
    $region9: #{tpu_custom_call.1} parent=1 // pred_fallthru
      _
    // Predicated region
    $region10: #{tpu_custom_call.1} parent=1 // pred_check
      _
    $region11: #{tpu_custom_call.1} parent=1 // pred_check_branch
      %40 = sbr.rel (0) target = $region13
    $region12: #{tpu_custom_call.1} parent=1 // pred_region
      %s42 = ssub.s32 2048, 2048
      %43 = vsyncadd [#allocation6], %s42
      %s44 = sshll.u32 [#allocation7], 4
      %s45 = int_to_ptr.vmem [resolvable:$true] %s44
      %50 = dma.hbm_to_vmem [thread:$0]  %s2, 2048, %s45, [#allocation6], 128, 128, 8
    $region13: #{tpu_custom_call.1} parent=1 // pred_fallthru
      _
    // Predicated region
    $region14: #{tpu_custom_call.1} parent=1 // pred_check
      _
    $region15: #{tpu_custom_call.1} parent=1 // pred_check_branch
      %52 = sbr.rel (0) target = $region17
    $region16: #{tpu_custom_call.1} parent=1 // pred_region
      %s54 = ssub.s32 2048, 2048
      %55 = vsyncadd [#allocation9], %s54
      %s56 = sshll.u32 [#allocation8], 4
      %s57 = int_to_ptr.vmem [resolvable:$true] %s56
      %62 = dma.hbm_to_vmem [thread:$0]  %s3, 2048, %s57, [#allocation9], 128, 128, 8
    $region17: #{tpu_custom_call.1} parent=1 // pred_fallthru
      _
    // Predicated region
    $region18: #{tpu_custom_call.1} parent=1 // pred_check
      _
    $region19: #{tpu_custom_call.1} parent=1 // pred_check_branch
      %64 = sbr.rel (0) target = $region21
    $region20: #{tpu_custom_call.1} parent=1 // pred_region
      %s66 = ssub.s32 2048, 2048
      %67 = vsyncadd [#allocation9], %s66
      %s68 = sshll.u32 [#allocation10], 4
      %s69 = int_to_ptr.vmem [resolvable:$true] %s68
      %74 = dma.hbm_to_vmem [thread:$0]  %s4, 2048, %s69, [#allocation9], 128, 128, 8
    $region21: #{tpu_custom_call.1} parent=1 // pred_fallthru
      _
    // Predicated region
    $region22: #{tpu_custom_call.1} parent=1 // pred_check
      _
    $region23: #{tpu_custom_call.1} parent=1 // pred_check_branch
      %76 = sbr.rel (0) target = $region25
    $region24: #{tpu_custom_call.1} parent=1 // pred_region
      _
    $region25: #{tpu_custom_call.1} parent=1 // pred_fallthru
      _
    // Predicated region
    $region26: #{tpu_custom_call.1} parent=1 // pred_check
      _
    $region27: #{tpu_custom_call.1} parent=1 // pred_check_branch
      %78 = sbr.rel (0) target = $region29
    $region28: #{tpu_custom_call.1} parent=1 // pred_region
      %79 = dma.done [#allocation3], 256
    $region29: #{tpu_custom_call.1} parent=1 // pred_fallthru
      _
    // Predicated region
    $region30: #{tpu_custom_call.1} parent=1 // pred_check
      _
    $region31: #{tpu_custom_call.1} parent=1 // pred_check_branch
      %81 = sbr.rel (0) target = $region33
    $region32: #{tpu_custom_call.1} parent=1 // pred_region
      %82 = dma.done [#allocation6], 2048
    $region33: #{tpu_custom_call.1} parent=1 // pred_fallthru
      _
    // Predicated region
    $region34: #{tpu_custom_call.1} parent=1 // pred_check
      _
    $region35: #{tpu_custom_call.1} parent=1 // pred_check_branch
      %84 = sbr.rel (0) target = $region37
    $region36: #{tpu_custom_call.1} parent=1 // pred_region
      %85 = dma.done [#allocation6], 2048
    $region37: #{tpu_custom_call.1} parent=1 // pred_fallthru
      _
    // Predicated region
    $region38: #{tpu_custom_call.1} parent=1 // pred_check
      _
    $region39: #{tpu_custom_call.1} parent=1 // pred_check_branch
      %87 = sbr.rel (0) target = $region41
    $region40: #{tpu_custom_call.1} parent=1 // pred_region
      %88 = dma.done [#allocation9], 2048
    $region41: #{tpu_custom_call.1} parent=1 // pred_fallthru
      _
    // Predicated region
    $region42: #{tpu_custom_call.1} parent=1 // pred_check
      _
    $region43: #{tpu_custom_call.1} parent=1 // pred_check_branch
      %90 = sbr.rel (0) target = $region45
    $region44: #{tpu_custom_call.1} parent=1 // pred_region
      %91 = dma.done [#allocation9], 2048
    $region45: #{tpu_custom_call.1} parent=1 // pred_fallthru
      _
    %v92 = vld [vmem:[#allocation5] sm:$0xff]
    %v93 = vld [vmem:[#allocation5 + $0x8] sm:$0xff]
    %v94 = vld [vmem:[#allocation5 + $0x10] sm:$0xff]
    %v95 = vld [vmem:[#allocation5 + $0x18] sm:$0xff]
    %v96 = vld [vmem:[#allocation5 + $0x20] sm:$0xff]
    %v97 = vld [vmem:[#allocation5 + $0x28] sm:$0xff]
    %v98 = vld [vmem:[#allocation5 + $0x30] sm:$0xff]
    %v99 = vld [vmem:[#allocation5 + $0x38] sm:$0xff]
    %v100 = vld [vmem:[#allocation5 + $0x40] sm:$0xff]
    %v101 = vld [vmem:[#allocation5 + $0x48] sm:$0xff]
    %v102 = vld [vmem:[#allocation5 + $0x50] sm:$0xff]
    %v103 = vld [vmem:[#allocation5 + $0x58] sm:$0xff]
    %v104 = vld [vmem:[#allocation5 + $0x60] sm:$0xff]
    %v105 = vld [vmem:[#allocation5 + $0x68] sm:$0xff]
    %v106 = vld [vmem:[#allocation5 + $0x70] sm:$0xff]
    %v107 = vld [vmem:[#allocation5 + $0x78] sm:$0xff]
    %v108 = vld [vmem:[#allocation7] sm:$0xff]
    %v109 = vld [vmem:[#allocation7 + $0x8] sm:$0xff]
    %v110 = vld [vmem:[#allocation7 + $0x10] sm:$0xff]
    %v111 = vld [vmem:[#allocation7 + $0x18] sm:$0xff]
    %v112 = vld [vmem:[#allocation7 + $0x20] sm:$0xff]
    %v113 = vld [vmem:[#allocation7 + $0x28] sm:$0xff]
    %v114 = vld [vmem:[#allocation7 + $0x30] sm:$0xff]
    %v115 = vld [vmem:[#allocation7 + $0x38] sm:$0xff]
    %v116 = vld [vmem:[#allocation7 + $0x40] sm:$0xff]
    %v117 = vld [vmem:[#allocation7 + $0x48] sm:$0xff]
    %v118 = vld [vmem:[#allocation7 + $0x50] sm:$0xff]
    %v119 = vld [vmem:[#allocation7 + $0x58] sm:$0xff]
    %v120 = vld [vmem:[#allocation7 + $0x60] sm:$0xff]
    %v121 = vld [vmem:[#allocation7 + $0x68] sm:$0xff]
    %v122 = vld [vmem:[#allocation7 + $0x70] sm:$0xff]
    %v123 = vld [vmem:[#allocation7 + $0x78] sm:$0xff]
    %v124 = vld [vmem:[#allocation8] sm:$0xff]
    %v125 = vld [vmem:[#allocation8 + $0x8] sm:$0xff]
    %v126 = vld [vmem:[#allocation8 + $0x10] sm:$0xff]
    %v127 = vld [vmem:[#allocation8 + $0x18] sm:$0xff]
    %v128 = vld [vmem:[#allocation8 + $0x20] sm:$0xff]
    %v129 = vld [vmem:[#allocation8 + $0x28] sm:$0xff]
    %v130 = vld [vmem:[#allocation8 + $0x30] sm:$0xff]
    %v131 = vld [vmem:[#allocation8 + $0x38] sm:$0xff]
    %v132 = vld [vmem:[#allocation8 + $0x40] sm:$0xff]
    %v133 = vld [vmem:[#allocation8 + $0x48] sm:$0xff]
    %v134 = vld [vmem:[#allocation8 + $0x50] sm:$0xff]
    %v135 = vld [vmem:[#allocation8 + $0x58] sm:$0xff]
    %v136 = vld [vmem:[#allocation8 + $0x60] sm:$0xff]
    %v137 = vld [vmem:[#allocation8 + $0x68] sm:$0xff]
    %v138 = vld [vmem:[#allocation8 + $0x70] sm:$0xff]
    %v139 = vld [vmem:[#allocation8 + $0x78] sm:$0xff]
    %v140 = vld [vmem:[#allocation10] sm:$0xff]
    %v141 = vld [vmem:[#allocation10 + $0x8] sm:$0xff]
    %v142 = vld [vmem:[#allocation10 + $0x10] sm:$0xff]
    %v143 = vld [vmem:[#allocation10 + $0x18] sm:$0xff]
    %v144 = vld [vmem:[#allocation10 + $0x20] sm:$0xff]
    %v145 = vld [vmem:[#allocation10 + $0x28] sm:$0xff]
    %v146 = vld [vmem:[#allocation10 + $0x30] sm:$0xff]
    %v147 = vld [vmem:[#allocation10 + $0x38] sm:$0xff]
    %v148 = vld [vmem:[#allocation10 + $0x40] sm:$0xff]
    %v149 = vld [vmem:[#allocation10 + $0x48] sm:$0xff]
    %v150 = vld [vmem:[#allocation10 + $0x50] sm:$0xff]
    %v151 = vld [vmem:[#allocation10 + $0x58] sm:$0xff]
    %v152 = vld [vmem:[#allocation10 + $0x60] sm:$0xff]
    %v153 = vld [vmem:[#allocation10 + $0x68] sm:$0xff]
    %v154 = vld [vmem:[#allocation10 + $0x70] sm:$0xff]
    %v155 = vld [vmem:[#allocation10 + $0x78] sm:$0xff]
    %v156 = vld [vmem:[%s5] sm:$0x1]
    %v158 = vlaneseq
    %v159 = vshrl.u32 %v158, 7
    %v160 = vsub.s32 0, %v159
    %v161 = vrot.slane %v156, %v160
    %v163 = vld [vmem:[#allocation2] sm:$0xff]
    %v164 = vld [vmem:[#allocation2 + $0x8] sm:$0xff]
    %v165 = vand.u32 2147483647, %v163
    %v166 = vand.u32 2147483647, %v164
    %167 = vmax.xlane.f32.xlu0 %v165
    %v168 = vpop.xlane.xlu0 %167
    %169 = vmax.xlane.f32.xlu0 %v166
    %v170 = vpop.xlane.xlu0 %169
    %v171 = vsub.f32 %v163, %v168
    %v172 = vsub.f32 %v164, %v170
    %v173 = vmul.f32 %v171, 1.442695
    %v174 = vpow.pop %v173
    %v175 = vmul.f32 %v172, 1.442695
    %v176 = vpow.pop %v175
    %v177 = vsub.f32 0.0, %v163
    %v178 = vsub.f32 0.0, %v164
    %v179 = vsub.f32 %v177, %v168
    %v180 = vsub.f32 %v178, %v170
    %v181 = vmul.f32 %v179, 1.442695
    %v182 = vpow.pop %v181
    %v183 = vmul.f32 %v180, 1.442695
    %v184 = vpow.pop %v183
    %185 = vmatprep.subr.mxu0 0.0
    %186 = vmatpush1.msra.mxu0 %v108
    %187 = vmatprep.subr.mxu0 0.0
    %188 = vmatpush1.msra.mxu0 %v109
    %189 = vmatprep.subr.mxu0 0.0
    %190 = vmatpush1.msra.mxu0 %v110
    %191 = vmatprep.subr.mxu0 0.0
    %192 = vmatpush1.msra.mxu0 %v111
    %193 = vmatprep.subr.mxu0 0.0
    %194 = vmatpush1.msra.mxu0 %v112
    %195 = vmatprep.subr.mxu0 0.0
    %196 = vmatpush1.msra.mxu0 %v113
    %197 = vmatprep.subr.mxu0 0.0
    %198 = vmatpush1.msra.mxu0 %v114
    %199 = vmatprep.subr.mxu0 0.0
    %200 = vmatpush1.msra.mxu0 %v115
    %201 = vmatprep.subr.mxu0 0.0
    %202 = vmatpush1.msra.mxu0 %v116
    %203 = vmatprep.subr.mxu0 0.0
    %204 = vmatpush1.msra.mxu0 %v117
    %205 = vmatprep.subr.mxu0 0.0
    %206 = vmatpush1.msra.mxu0 %v118
    %207 = vmatprep.subr.mxu0 0.0
    %208 = vmatpush1.msra.mxu0 %v119
    %209 = vmatprep.subr.mxu0 0.0
    %210 = vmatpush1.msra.mxu0 %v120
    %211 = vmatprep.subr.mxu0 0.0
    %212 = vmatpush1.msra.mxu0 %v121
    %213 = vmatprep.subr.mxu0 0.0
    %214 = vmatpush1.msra.mxu0 %v122
    %215 = vmatprep.subr.mxu0 0.0
    %216 = vmatpush1.msra.mxu0 %v123
    %217 = vmatprep.subr.mxu0 0.0
    %218 = vmatpush1.msra.mxu0 0.0
    %219 = vmatprep.subr.mxu0 0.0
    %220 = vmatpush1.msra.mxu0 0.0
    %221 = vmatprep.subr.mxu0 0.0
    %222 = vmatpush1.msra.mxu0 0.0
    %223 = vmatprep.subr.mxu0 0.0
    %224 = vmatpush1.msra.mxu0 0.0
    %225 = vmatprep.subr.mxu0 0.0
    %226 = vmatpush1.msra.mxu0 0.0
    %227 = vmatprep.subr.mxu0 0.0
    %228 = vmatpush1.msra.mxu0 0.0
    %229 = vmatprep.subr.mxu0 0.0
    %230 = vmatpush1.msra.mxu0 0.0
    %231 = vmatprep.subr.mxu0 0.0
    %232 = vmatpush1.msra.mxu0 0.0
    %233 = vmatprep.subr.mxu0 0.0
    %234 = vmatpush1.msra.mxu0 0.0
    %235 = vmatprep.subr.mxu0 0.0
    %236 = vmatpush1.msra.mxu0 0.0
    %237 = vmatprep.subr.mxu0 0.0
    %238 = vmatpush1.msra.mxu0 0.0
    %239 = vmatprep.subr.mxu0 0.0
    %240 = vmatpush1.msra.mxu0 0.0
    %241 = vmatprep.subr.mxu0 0.0
    %242 = vmatpush1.msra.mxu0 0.0
    %243 = vmatprep.subr.mxu0 0.0
    %244 = vmatpush1.msra.mxu0 0.0
    %245 = vmatprep.subr.mxu0 0.0
    %246 = vmatpush1.msra.mxu0 0.0
    %247 = vmatprep.subr.mxu0 0.0
    %248 = vmatpush1.msra.mxu0 0.0
    %249 = vmatprep.mubr.f32.mxu0 0.0
    %250 = vmatmul.mubr.f32.gmra.mrb[0].mxu0 %v182
    %v251 = vpop.f32.mrb[0].mxu0
    %v252 = vadd.f32 0.0, %v251
    %v253 = vpop.f32.mrb[0].mxu0
    %254 = vmatprep.mubr.f32.mxu0 0.0
    %255 = vmatmul.mubr.f32.gmra.mrb[0].mxu0 %v184
    %v256 = vpop.f32.mrb[0].mxu0
    %v257 = vadd.f32 0.0, %v256
    %v258 = vpop.f32.mrb[0].mxu0
    %259 = vdwg.mxu0
    %260 = vmatprep.subr.mxu0 0.0
    %261 = vmatpush1.msra.mxu0 %v92
    %262 = vmatprep.subr.mxu0 0.0
    %263 = vmatpush1.msra.mxu0 %v93
    %264 = vmatprep.subr.mxu0 0.0
    %265 = vmatpush1.msra.mxu0 %v94
    %266 = vmatprep.subr.mxu0 0.0
    %267 = vmatpush1.msra.mxu0 %v95
    %268 = vmatprep.subr.mxu0 0.0
    %269 = vmatpush1.msra.mxu0 %v96
    %270 = vmatprep.subr.mxu0 0.0
    %271 = vmatpush1.msra.mxu0 %v97
    %272 = vmatprep.subr.mxu0 0.0
    %273 = vmatpush1.msra.mxu0 %v98
    %274 = vmatprep.subr.mxu0 0.0
    %275 = vmatpush1.msra.mxu0 %v99
    %276 = vmatprep.subr.mxu0 0.0
    %277 = vmatpush1.msra.mxu0 %v100
    %278 = vmatprep.subr.mxu0 0.0
    %279 = vmatpush1.msra.mxu0 %v101
    %280 = vmatprep.subr.mxu0 0.0
    %281 = vmatpush1.msra.mxu0 %v102
    %282 = vmatprep.subr.mxu0 0.0
    %283 = vmatpush1.msra.mxu0 %v103
    %284 = vmatprep.subr.mxu0 0.0
    %285 = vmatpush1.msra.mxu0 %v104
    %286 = vmatprep.subr.mxu0 0.0
    %287 = vmatpush1.msra.mxu0 %v105
    %288 = vmatprep.subr.mxu0 0.0
    %289 = vmatpush1.msra.mxu0 %v106
    %290 = vmatprep.subr.mxu0 0.0
    %291 = vmatpush1.msra.mxu0 %v107
    %292 = vmatprep.subr.mxu0 0.0
    %293 = vmatpush1.msra.mxu0 0.0
    %294 = vmatprep.subr.mxu0 0.0
    %295 = vmatpush1.msra.mxu0 0.0
    %296 = vmatprep.subr.mxu0 0.0
    %297 = vmatpush1.msra.mxu0 0.0
    %298 = vmatprep.subr.mxu0 0.0
    %299 = vmatpush1.msra.mxu0 0.0
    %300 = vmatprep.subr.mxu0 0.0
    %301 = vmatpush1.msra.mxu0 0.0
    %302 = vmatprep.subr.mxu0 0.0
    %303 = vmatpush1.msra.mxu0 0.0
    %304 = vmatprep.subr.mxu0 0.0
    %305 = vmatpush1.msra.mxu0 0.0
    %306 = vmatprep.subr.mxu0 0.0
    %307 = vmatpush1.msra.mxu0 0.0
    %308 = vmatprep.subr.mxu0 0.0
    %309 = vmatpush1.msra.mxu0 0.0
    %310 = vmatprep.subr.mxu0 0.0
    %311 = vmatpush1.msra.mxu0 0.0
    %312 = vmatprep.subr.mxu0 0.0
    %313 = vmatpush1.msra.mxu0 0.0
    %314 = vmatprep.subr.mxu0 0.0
    %315 = vmatpush1.msra.mxu0 0.0
    %316 = vmatprep.subr.mxu0 0.0
    %317 = vmatpush1.msra.mxu0 0.0
    %318 = vmatprep.subr.mxu0 0.0
    %319 = vmatpush1.msra.mxu0 0.0
    %320 = vmatprep.subr.mxu0 0.0
    %321 = vmatpush1.msra.mxu0 0.0
    %322 = vmatprep.subr.mxu0 0.0
    %323 = vmatpush1.msra.mxu0 0.0
    %324 = vmatprep.mubr.f32.mxu0 0.0
    %325 = vmatmul.mubr.f32.gmra.mrb[0].mxu0 %v174
    %v326 = vpop.f32.mrb[0].mxu0
    %v327 = vadd.f32 %v252, %v326
    %v328 = vpop.f32.mrb[0].mxu0
    %329 = vmatprep.mubr.f32.mxu0 0.0
    %330 = vmatmul.mubr.f32.gmra.mrb[0].mxu0 %v176
    %v331 = vpop.f32.mrb[0].mxu0
    %v332 = vadd.f32 %v257, %v331
    %v333 = vpop.f32.mrb[0].mxu0
    %334 = vdwg.mxu0
    %v335 = vadd.f32 %v327, %v161
    %v336 = vadd.f32 %v332, %v161
    %v337 = vrcp.pop %v335
    %v338 = vrcp.pop %v336
    %339 = vmatprep.subr.mxu0 0.0
    %340 = vmatpush1.msra.mxu0 %v124
    %341 = vmatprep.subr.mxu0 0.0
    %342 = vmatpush1.msra.mxu0 %v125
    %343 = vmatprep.subr.mxu0 0.0
    %344 = vmatpush1.msra.mxu0 %v126
    %345 = vmatprep.subr.mxu0 0.0
    %346 = vmatpush1.msra.mxu0 %v127
    %347 = vmatprep.subr.mxu0 0.0
    %348 = vmatpush1.msra.mxu0 %v128
    %349 = vmatprep.subr.mxu0 0.0
    %350 = vmatpush1.msra.mxu0 %v129
    %351 = vmatprep.subr.mxu0 0.0
    %352 = vmatpush1.msra.mxu0 %v130
    %353 = vmatprep.subr.mxu0 0.0
    %354 = vmatpush1.msra.mxu0 %v131
    %355 = vmatprep.subr.mxu0 0.0
    %356 = vmatpush1.msra.mxu0 %v132
    %357 = vmatprep.subr.mxu0 0.0
    %358 = vmatpush1.msra.mxu0 %v133
    %359 = vmatprep.subr.mxu0 0.0
    %360 = vmatpush1.msra.mxu0 %v134
    %361 = vmatprep.subr.mxu0 0.0
    %362 = vmatpush1.msra.mxu0 %v135
    %363 = vmatprep.subr.mxu0 0.0
    %364 = vmatpush1.msra.mxu0 %v136
    %365 = vmatprep.subr.mxu0 0.0
    %366 = vmatpush1.msra.mxu0 %v137
    %367 = vmatprep.subr.mxu0 0.0
    %368 = vmatpush1.msra.mxu0 %v138
    %369 = vmatprep.subr.mxu0 0.0
    %370 = vmatpush1.msra.mxu0 %v139
    %371 = vmatprep.subr.mxu0 0.0
    %372 = vmatpush1.msra.mxu0 0.0
    %373 = vmatprep.subr.mxu0 0.0
    %374 = vmatpush1.msra.mxu0 0.0
    %375 = vmatprep.subr.mxu0 0.0
    %376 = vmatpush1.msra.mxu0 0.0
    %377 = vmatprep.subr.mxu0 0.0
    %378 = vmatpush1.msra.mxu0 0.0
    %379 = vmatprep.subr.mxu0 0.0
    %380 = vmatpush1.msra.mxu0 0.0
    %381 = vmatprep.subr.mxu0 0.0
    %382 = vmatpush1.msra.mxu0 0.0
    %383 = vmatprep.subr.mxu0 0.0
    %384 = vmatpush1.msra.mxu0 0.0
    %385 = vmatprep.subr.mxu0 0.0
    %386 = vmatpush1.msra.mxu0 0.0
    %387 = vmatprep.subr.mxu0 0.0
    %388 = vmatpush1.msra.mxu0 0.0
    %389 = vmatprep.subr.mxu0 0.0
    %390 = vmatpush1.msra.mxu0 0.0
    %391 = vmatprep.subr.mxu0 0.0
    %392 = vmatpush1.msra.mxu0 0.0
    %393 = vmatprep.subr.mxu0 0.0
    %394 = vmatpush1.msra.mxu0 0.0
    %395 = vmatprep.subr.mxu0 0.0
    %396 = vmatpush1.msra.mxu0 0.0
    %397 = vmatprep.subr.mxu0 0.0
    %398 = vmatpush1.msra.mxu0 0.0
    %399 = vmatprep.subr.mxu0 0.0
    %400 = vmatpush1.msra.mxu0 0.0
    %401 = vmatprep.subr.mxu0 0.0
    %402 = vmatpush1.msra.mxu0 0.0
    %403 = vmatprep.mubr.f32.mxu0 0.0
    %404 = vmatmul.mubr.f32.gmra.mrb[0].mxu0 %v337
    %v405 = vpop.f32.mrb[0].mxu0
    %v406 = vadd.f32 0.0, %v405
    %v407 = vpop.f32.mrb[0].mxu0
    %408 = vmatprep.mubr.f32.mxu0 0.0
    %409 = vmatmul.mubr.f32.gmra.mrb[0].mxu0 %v338
    %v410 = vpop.f32.mrb[0].mxu0
    %v411 = vadd.f32 0.0, %v410
    %v412 = vpop.f32.mrb[0].mxu0
    %413 = vdwg.mxu0
    %v414 = vmul.f32 %v174, %v406
    %v415 = vmul.f32 %v176, %v411
    %416 = vmatprep.subr.mxu0 0.0
    %417 = vmatpush1.msra.mxu0 %v140
    %418 = vmatprep.subr.mxu0 0.0
    %419 = vmatpush1.msra.mxu0 %v141
    %420 = vmatprep.subr.mxu0 0.0
    %421 = vmatpush1.msra.mxu0 %v142
    %422 = vmatprep.subr.mxu0 0.0
    %423 = vmatpush1.msra.mxu0 %v143
    %424 = vmatprep.subr.mxu0 0.0
    %425 = vmatpush1.msra.mxu0 %v144
    %426 = vmatprep.subr.mxu0 0.0
    %427 = vmatpush1.msra.mxu0 %v145
    %428 = vmatprep.subr.mxu0 0.0
    %429 = vmatpush1.msra.mxu0 %v146
    %430 = vmatprep.subr.mxu0 0.0
    %431 = vmatpush1.msra.mxu0 %v147
    %432 = vmatprep.subr.mxu0 0.0
    %433 = vmatpush1.msra.mxu0 %v148
    %434 = vmatprep.subr.mxu0 0.0
    %435 = vmatpush1.msra.mxu0 %v149
    %436 = vmatprep.subr.mxu0 0.0
    %437 = vmatpush1.msra.mxu0 %v150
    %438 = vmatprep.subr.mxu0 0.0
    %439 = vmatpush1.msra.mxu0 %v151
    %440 = vmatprep.subr.mxu0 0.0
    %441 = vmatpush1.msra.mxu0 %v152
    %442 = vmatprep.subr.mxu0 0.0
    %443 = vmatpush1.msra.mxu0 %v153
    %444 = vmatprep.subr.mxu0 0.0
    %445 = vmatpush1.msra.mxu0 %v154
    %446 = vmatprep.subr.mxu0 0.0
    %447 = vmatpush1.msra.mxu0 %v155
    %448 = vmatprep.subr.mxu0 0.0
    %449 = vmatpush1.msra.mxu0 0.0
    %450 = vmatprep.subr.mxu0 0.0
    %451 = vmatpush1.msra.mxu0 0.0
    %452 = vmatprep.subr.mxu0 0.0
    %453 = vmatpush1.msra.mxu0 0.0
    %454 = vmatprep.subr.mxu0 0.0
    %455 = vmatpush1.msra.mxu0 0.0
    %456 = vmatprep.subr.mxu0 0.0
    %457 = vmatpush1.msra.mxu0 0.0
    %458 = vmatprep.subr.mxu0 0.0
    %459 = vmatpush1.msra.mxu0 0.0
    %460 = vmatprep.subr.mxu0 0.0
    %461 = vmatpush1.msra.mxu0 0.0
    %462 = vmatprep.subr.mxu0 0.0
    %463 = vmatpush1.msra.mxu0 0.0
    %464 = vmatprep.subr.mxu0 0.0
    %465 = vmatpush1.msra.mxu0 0.0
    %466 = vmatprep.subr.mxu0 0.0
    %467 = vmatpush1.msra.mxu0 0.0
    %468 = vmatprep.subr.mxu0 0.0
    %469 = vmatpush1.msra.mxu0 0.0
    %470 = vmatprep.subr.mxu0 0.0
    %471 = vmatpush1.msra.mxu0 0.0
    %472 = vmatprep.subr.mxu0 0.0
    %473 = vmatpush1.msra.mxu0 0.0
    %474 = vmatprep.subr.mxu0 0.0
    %475 = vmatpush1.msra.mxu0 0.0
    %476 = vmatprep.subr.mxu0 0.0
    %477 = vmatpush1.msra.mxu0 0.0
    %478 = vmatprep.subr.mxu0 0.0
    %479 = vmatpush1.msra.mxu0 0.0
    %480 = vmatprep.mubr.f32.mxu0 0.0
    %481 = vmatmul.mubr.f32.gmra.mrb[0].mxu0 %v337
    %v482 = vpop.f32.mrb[0].mxu0
    %v483 = vadd.f32 0.0, %v482
    %v484 = vpop.f32.mrb[0].mxu0
    %485 = vmatprep.mubr.f32.mxu0 0.0
    %486 = vmatmul.mubr.f32.gmra.mrb[0].mxu0 %v338
    %v487 = vpop.f32.mrb[0].mxu0
    %v488 = vadd.f32 0.0, %v487
    %v489 = vpop.f32.mrb[0].mxu0
    %490 = vdwg.mxu0
    %v491 = vmul.f32 %v182, %v483
    %v492 = vmul.f32 %v184, %v488
    %v493 = vadd.f32 %v414, %v491
    %v494 = vadd.f32 %v415, %v492
    %495 = vst [vmem:[#allocation11] sm:$0xff] %v493
    %496 = vst [vmem:[#allocation11 + $0x8] sm:$0xff] %v494
    // Predicated region
    $region46: #{tpu_custom_call.1} parent=1 // pred_check
      _
    $region47: #{tpu_custom_call.1} parent=1 // pred_check_branch
      %498 = sbr.rel (0) target = $region49
    $region48: #{tpu_custom_call.1} parent=1 // pred_region
      %s500 = ssub.s32 256, 256
      %501 = vsyncadd [#allocation4], %s500
      %s502 = sshll.u32 [#allocation11], 4
      %s503 = int_to_ptr.vmem [resolvable:$true] %s502
      %508 = dma.vmem_to_hbm [thread:$0]  %s503, 256, %s6, [#allocation4], 128, 128, 8
    $region49: #{tpu_custom_call.1} parent=1 // pred_fallthru
      _
    // Predicated region
    $region50: #{tpu_custom_call.1} parent=1 // pred_check
      _
    $region51: #{tpu_custom_call.1} parent=1 // pred_check_branch
      %510 = sbr.rel (0) target = $region53
    $region52: #{tpu_custom_call.1} parent=1 // pred_region
      %511 = dma.done [#allocation4], 256
    $region53: #{tpu_custom_call.1} parent=1 // pred_fallthru
      _
    %512 = vsyncpa [#allocation3], 1
    %513 = vsyncpa [#allocation6], 1
    %514 = vsyncpa [#allocation9], 1
    %515 = vsyncpa [#allocation4], 1

</llo_original>
